<compile_context>
chip_gen: v5e
topology: v5e:2x2
jax: 0.10.0
libtpu: 0.0.40
codegen_flags: <defaults>
</compile_context>

<pallas_src>
import functools

import jax
import jax.numpy as jnp
from jax.experimental import pallas as pl
from jax.experimental.pallas import tpu as pltpu

LANES = 128
MAX_BLOCK_ROWS = 4096  # 4096x128 f32 = 2 MiB/buffer; 2 inputs x 2 bufs = 8 MiB
                       # -> fits default scoped VMEM on v5e (16 MiB) and v6e/v7x (32 MiB).


def _round_up(v, m):
    return ((v + m - 1) // m) * m


def _focal_kernel(x_ref, y_ref, psum_ref, *, gamma, alpha, valid_in_last, block_rows):
    x = x_ref[...].astype(jnp.float32)
    y = y_ref[...].astype(jnp.float32)

    # Stable BCE-with-logits (reduction='none').  exp(-|x|) is shared between
    # the BCE log1p term and the sigmoid below (one exp instead of two).
    e = jnp.exp(-jnp.abs(x))
    bce = jnp.maximum(x, 0.0) - x * y + jnp.log1p(e)

    # sigmoid(x):  x >= 0 -> 1/(1+e) ;  x < 0 -> e/(1+e)   (exact)
    inv = pl.reciprocal(1.0 + e, approx=False)
    p = jnp.where(x >= 0.0, inv, e * inv)

    p_t = y * p + (1.0 - y) * (1.0 - p)
    alpha_factor = y * alpha + (1.0 - y) * (1.0 - alpha)

    t = jnp.maximum(1.0 - p_t, 0.0)
    if gamma == 1.5:
        modulating_factor = t * jnp.sqrt(t)
    elif gamma == 2.0:
        modulating_factor = t * t
    elif gamma == 1.0:
        modulating_factor = t
    elif gamma == 0.0:
        modulating_factor = jnp.ones_like(t)
    else:
        modulating_factor = t ** gamma

    loss = bce * alpha_factor * modulating_factor

    if valid_in_last is None:
        # Exact tiling: every element of every block is valid.
        psum_ref[...] = loss.reshape(-1, 8, LANES).sum(axis=0)
    else:
        # Only the last grid step can contain junk (clamped DMA / lane pad);
        # gate the iota/compare/select there and keep all other blocks clean.
        is_last = pl.program_id(0) == pl.num_programs(0) - 1

        @pl.when(jnp.logical_not(is_last))
        def _():
            psum_ref[...] = loss.reshape(-1, 8, LANES).sum(axis=0)

        @pl.when(is_last)
        def _():
            # Block-local flat index: max block_rows*128 = 524288 << 2^31,
            # so no int32 overflow regardless of total input size.
            row = jax.lax.broadcasted_iota(jnp.int32, (block_rows, LANES), 0)
            lane = jax.lax.broadcasted_iota(jnp.int32, (block_rows, LANES), 1)
            idx = row * LANES + lane
            masked = jnp.where(idx < valid_in_last, loss, 0.0)
            psum_ref[...] = masked.reshape(-1, 8, LANES).sum(axis=0)


def focal_loss(output, true, gamma=1.5, alpha=0.25, max_block_rows=MAX_BLOCK_ROWS):
    """FocalLoss(BCEWithLogitsLoss(reduction='mean')) forward.

    Inputs may be any float dtype (pass bf16 logits/targets on v5e/v6e to halve
    HBM traffic); the kernel casts to f32 internally.
    """
    assert output.shape == true.shape
    n_elems = int(output.size)
    assert n_elems > 0

    x = output.reshape(-1)
    y = true.reshape(-1)

    # Sublane alignment depends on the narrowest input dtype.
    min_item = min(jnp.dtype(x.dtype).itemsize, jnp.dtype(y.dtype).itemsize)
    row_align = {4: 8, 2: 16, 1: 32}.get(min_item, 8)

    # Rows of the (rows, 128) view.  Pad ONLY when n_elems isn't a multiple of
    # 128 (or the whole input is smaller than one aligned tile) -- never round
    # up to a block multiple: jnp.pad re-streams both full inputs through HBM.
    rows = -(-n_elems // LANES)
    if rows < row_align:
        rows = row_align
    pad = rows * LANES - n_elems
    if pad:
        x = jnp.pad(x, (0, pad))
        y = jnp.pad(y, (0, pad))
    x2 = x.reshape(rows, LANES)
    y2 = y.reshape(rows, LANES)

    # Block size: as big as VMEM comfortably allows (amortizes the ~0.35us
    # per-grid-step overhead), but no larger than half the input (sublane
    # aligned) so the "parallel" grid has >= 2 steps and can split across both
    # v7x TensorCores, and never larger than the (aligned) array itself.
    block_rows = min(
        _round_up(max_block_rows, row_align),
        max(_round_up(-(-rows // 2), row_align), row_align),
        (rows // row_align) * row_align,
    )
    grid = -(-rows // block_rows)

    # The final block is ragged (clamped DMA and/or lane padding) whenever the
    # grid covers more elements than n_elems; only that block needs masking.
    covered = grid * block_rows * LANES
    if covered > n_elems:
        valid_in_last = n_elems - (grid - 1) * block_rows * LANES
    else:
        valid_in_last = None

    kernel = functools.partial(
        _focal_kernel,
        gamma=float(gamma),
        alpha=float(alpha),
        valid_in_last=valid_in_last,
        block_rows=block_rows,
    )

    # TODO(synk): on v7x, if xprof shows exposed input DMA, sweep
    # pipeline_mode=pl.Buffered(3) on the in_specs (costs 1 extra block/input).
    in_spec = pl.BlockSpec((block_rows, LANES), lambda i: (i, 0))
    partials = pl.pallas_call(
        kernel,
        out_shape=jax.ShapeDtypeStruct((grid * 8, LANES), jnp.float32),
        grid_spec=pltpu.PrefetchScalarGridSpec(
            num_scalar_prefetch=0,
            grid=(grid,),
            in_specs=[in_spec, in_spec],
            out_specs=pl.BlockSpec((8, LANES), lambda i: (i, 0)),
        ),
        compiler_params=pltpu.CompilerParams(
            dimension_semantics=("parallel",),
        ),
    )(x2, y2)

    # Tiny final reduction (grid*8*128 f32 values) -> mean over original count.
    return jnp.sum(partials) / n_elems


def focal_loss_ref(output, true, gamma=1.5, alpha=0.25):
    x = output.astype(jnp.float32)
    y = true.astype(jnp.float32)
    bce = jnp.maximum(x, 0.0) - x * y + jnp.log1p(jnp.exp(-jnp.abs(x)))
    p = jax.nn.sigmoid(x)
    p_t = y * p + (1.0 - y) * (1.0 - p)
    af = y * alpha + (1.0 - y) * (1.0 - alpha)
    mf = (1.0 - p_t) ** gamma
    return jnp.mean(bce * af * mf)


if __name__ == "__main__":
    key = jax.random.PRNGKey(0)
    k1, k2 = jax.random.split(key)
    # NCHW logits / targets, as YOLOv5 objectness/class maps would be.
    shape = (2, 4, 16, 16)
    output = jax.random.normal(k1, shape, dtype=jnp.float32)
    true = (jax.random.uniform(k2, shape) > 0.5).astype(jnp.float32)

    loss = focal_loss(output, true, gamma=1.5, alpha=0.25)
    jax.block_until_ready(loss)

    ref = focal_loss_ref(output, true, gamma=1.5, alpha=0.25)
    assert jnp.allclose(loss, ref, rtol=1e-5, atol=1e-6), (loss, ref)

    # Non-tile-multiple size: exercises lane padding + last-block iota mask.
    k3, k4 = jax.random.split(k2)
    shape2 = (3, 5, 7, 11)  # 1155 elements -> ragged last block, masked tail
    out2 = jax.random.normal(k3, shape2, dtype=jnp.float32)
    tgt2 = (jax.random.uniform(k4, shape2) > 0.5).astype(jnp.float32)
    l2 = focal_loss(out2, tgt2)
    jax.block_until_ready(l2)
    assert jnp.allclose(l2, focal_loss_ref(out2, tgt2), rtol=1e-5, atol=1e-6)

    # Mixed/narrow dtypes (bf16 logits): exercises 16-row sublane alignment
    # and the native-dtype input path (halved HBM traffic on v5e/v6e).
    k5, k6 = jax.random.split(k4)
    shape3 = (2, 3, 20, 20)  # 2400 elements
    out3 = jax.random.normal(k5, shape3, dtype=jnp.bfloat16)
    tgt3 = (jax.random.uniform(k6, shape3) > 0.5).astype(jnp.float32)
    l3 = focal_loss(out3, tgt3)
    jax.block_until_ready(l3)
    assert jnp.allclose(l3, focal_loss_ref(out3, tgt3), rtol=1e-5, atol=1e-6)

    print("KERNEL_OK")
</pallas_src>

<mosaic_0001>
module attributes {stable_mosaic.version = 11 : i64} {
  func.func @_focal_kernel(%arg0: i32, %arg1: memref<8x128xf32, #tpu.memory_space<vmem>>, %arg2: memref<8x128xf32, #tpu.memory_space<vmem>>, %arg3: memref<8x128xf32, #tpu.memory_space<vmem>>) attributes {dimension_semantics = [#tpu.dimension_semantics<parallel>], iteration_bounds = array<i64: 2>, scalar_prefetch = 0 : i64, scratch_operands = 0 : i64, tpu.core_type = #tpu.core_type<tc>, window_params = [{transform_indices = @transform_0, window_bounds = array<i64: 8, 128>}, {transform_indices = @transform_1, window_bounds = array<i64: 8, 128>}, {transform_indices = @transform_2, window_bounds = array<i64: 8, 128>}]} {
    %c0 = arith.constant 0 : index
    %c0_0 = arith.constant 0 : index
    %0 = vector.load %arg1[%c0, %c0_0] : memref<8x128xf32, #tpu.memory_space<vmem>>, vector<8x128xf32>
    %c0_1 = arith.constant 0 : index
    %c0_2 = arith.constant 0 : index
    %1 = vector.load %arg2[%c0_1, %c0_2] : memref<8x128xf32, #tpu.memory_space<vmem>>, vector<8x128xf32>
    %2 = math.absf %0 : vector<8x128xf32>
    %cst = arith.constant 0.000000e+00 : f32
    %3 = vector.broadcast %cst : f32 to vector<8x128xf32>
    %4 = arith.subf %3, %2 : vector<8x128xf32>
    %5 = math.exp %4 : vector<8x128xf32>
    %cst_3 = arith.constant 0.000000e+00 : f32
    %6 = vector.broadcast %cst_3 : f32 to vector<8x128xf32>
    %7 = arith.maximumf %0, %6 : vector<8x128xf32>
    %8 = arith.mulf %0, %1 : vector<8x128xf32>
    %9 = arith.subf %7, %8 : vector<8x128xf32>
    %10 = math.log1p %5 : vector<8x128xf32>
    %11 = arith.addf %9, %10 : vector<8x128xf32>
    %cst_4 = arith.constant 1.000000e+00 : f32
    %12 = vector.broadcast %cst_4 : f32 to vector<8x128xf32>
    %13 = arith.addf %12, %5 : vector<8x128xf32>
    %14 = tpu.reciprocal %13 : vector<8x128xf32> -> vector<8x128xf32>
    %cst_5 = arith.constant 0.000000e+00 : f32
    %15 = vector.broadcast %cst_5 : f32 to vector<8x128xf32>
    %16 = arith.cmpf oge, %0, %15 : vector<8x128xf32>
    %17 = arith.mulf %5, %14 : vector<8x128xf32>
    %18 = arith.select %16, %14, %17 : vector<8x128xi1>, vector<8x128xf32>
    %19 = arith.mulf %1, %18 : vector<8x128xf32>
    %cst_6 = arith.constant 1.000000e+00 : f32
    %20 = vector.broadcast %cst_6 : f32 to vector<8x128xf32>
    %21 = arith.subf %20, %1 : vector<8x128xf32>
    %cst_7 = arith.constant 1.000000e+00 : f32
    %22 = vector.broadcast %cst_7 : f32 to vector<8x128xf32>
    %23 = arith.subf %22, %18 : vector<8x128xf32>
    %24 = arith.mulf %21, %23 : vector<8x128xf32>
    %25 = arith.addf %19, %24 : vector<8x128xf32>
    %cst_8 = arith.constant 2.500000e-01 : f32
    %26 = vector.broadcast %cst_8 : f32 to vector<8x128xf32>
    %27 = arith.mulf %1, %26 : vector<8x128xf32>
    %cst_9 = arith.constant 1.000000e+00 : f32
    %28 = vector.broadcast %cst_9 : f32 to vector<8x128xf32>
    %29 = arith.subf %28, %1 : vector<8x128xf32>
    %cst_10 = arith.constant 7.500000e-01 : f32
    %30 = vector.broadcast %cst_10 : f32 to vector<8x128xf32>
    %31 = arith.mulf %29, %30 : vector<8x128xf32>
    %32 = arith.addf %27, %31 : vector<8x128xf32>
    %cst_11 = arith.constant 1.000000e+00 : f32
    %33 = vector.broadcast %cst_11 : f32 to vector<8x128xf32>
    %34 = arith.subf %33, %25 : vector<8x128xf32>
    %cst_12 = arith.constant 0.000000e+00 : f32
    %35 = vector.broadcast %cst_12 : f32 to vector<8x128xf32>
    %36 = arith.maximumf %34, %35 : vector<8x128xf32>
    %37 = math.sqrt %36 : vector<8x128xf32>
    %38 = arith.mulf %36, %37 : vector<8x128xf32>
    %39 = arith.mulf %11, %32 : vector<8x128xf32>
    %40 = arith.mulf %39, %38 : vector<8x128xf32>
    %41 = vector.shape_cast %40 : vector<8x128xf32> to vector<1x8x128xf32>
    %cst_13 = arith.constant dense<0.000000e+00> : vector<8x128xf32>
    %42 = vector.multi_reduction <add>, %41, %cst_13 [0] : vector<1x8x128xf32> to vector<8x128xf32>
    %c0_14 = arith.constant 0 : index
    %c0_15 = arith.constant 0 : index
    %43 = vector.load %arg3[%c0_14, %c0_15] : memref<8x128xf32, #tpu.memory_space<vmem>>, vector<8x128xf32>
    tpu.vector_store %arg3[%c0_14, %c0_15], %42 {strides = array<i32>} : memref<8x128xf32, #tpu.memory_space<vmem>>, vector<8x128xf32>,
    return
  }
  func.func @transform_0(%arg0: i32) -> (i32, i32) {
    %c0_i32 = arith.constant 0 : i32
    %c0_i32_0 = arith.constant 0 : i32
    return %arg0, %c0_i32 : i32, i32
  }
  func.func @transform_1(%arg0: i32) -> (i32, i32) {
    %c0_i32 = arith.constant 0 : i32
    %c0_i32_0 = arith.constant 0 : i32
    return %arg0, %c0_i32 : i32, i32
  }
  func.func @transform_2(%arg0: i32) -> (i32, i32) {
    %c0_i32 = arith.constant 0 : i32
    %c0_i32_0 = arith.constant 0 : i32
    return %arg0, %c0_i32 : i32, i32
  }
}

</mosaic_0001>

<llo_original>
// kernel: tpu_custom_call.1
$region0: #{tpu_custom_call.1}
  #allocation0 [shape = 'u32[]', space=smem, size = 0x4, offset = 0x4, fixed_abs, tag = 'smem constant byte address 0x4 - core index']
  #allocation1 [shape = 'u32[72,128]{1,0:T(1,128)}', space=vmem, size = 0x9000, scoped, tag = 'internal scratch']
  %s0 = inlined_call_operand.hbm [shape: f32[16,128], index: 0, kind: input, shape index: {}]
  %s1 = inlined_call_operand.hbm [shape: f32[16,128], index: 1, kind: input, shape index: {}]
  %s2 = inlined_call_operand.hbm [shape: f32[16,128], index: 2, kind: output, shape index: {}]
  %s3 = sld [smem:[#allocation0]]
  $region49: #{tpu_custom_call.1} parent=0
    _
  %s5 = ssub.s32 1, %s3
  %s6 = scalar_select 0, %s5, %s3
  $region1: #{tpu_custom_call.1} parent=0
    #allocation2 [shape = 'u8[8192]{0}', space=vmem, size = 0x2000, scoped, tag = 'input window, operand 0']
    #allocation3 [shape = 's32[2]{0}', space=sflag, size = 0x8, scoped, tag = 'scoped memory for tpu_custom_call.1']
    #allocation4 [shape = 's32[2]{0}', space=sflag, size = 0x8, scoped, tag = 'scoped memory for tpu_custom_call.1']
    #allocation5 [shape = 'u8[8192]{0}', space=vmem, size = 0x2000, scoped, tag = 'input window, operand 1']
    #allocation6 [shape = 's32[2]{0}', space=sflag, size = 0x8, scoped, tag = 'scoped memory for tpu_custom_call.1']
    #allocation7 [shape = 'u8[8192]{0}', space=vmem, size = 0x2000, scoped, tag = 'output window, operand 0']
    %7 = vsyncpa [#allocation3], 0
    %s8 = scalar_lea.sflag [#allocation3], 1
    %9 = vsyncpa %s8, 0
    %10 = vsyncpa [#allocation6], 0
    %s11 = scalar_lea.sflag [#allocation6], 1
    %12 = vsyncpa %s11, 0
    %13 = vsyncpa [#allocation4], 0
    %s14 = scalar_lea.sflag [#allocation4], 1
    %15 = vsyncpa %s14, 0
    loop: start=0, step=1, limit=4
    $region2: #{tpu_custom_call.1} parent=1 // loop_pre_header
      _
    $region3: #{tpu_custom_call.1} parent=1 // loop_header
      %s17 = sphi 0, %s21
      %p18 = scmp.ge.s32.totalorder %s17, 4
      %s27 = sphi 0, %s29
      %s30 = sphi 0, %s27
      %s31 = sphi 0, %s30
      %s47 = sphi 0, %s31
      %s53 = sphi 0, %s55
      %s56 = sphi 0, %s53
      %s57 = sphi 0, %s56
      %s73 = sphi 0, %s57
      %s79 = sphi 0, %s81
      %s82 = sphi 0, %s79
      %s83 = sphi 0, %s82
      %s99 = sphi 0, %s83
    $region4: #{tpu_custom_call.1} parent=1 // loop_header_branch
      %20 = sbr.rel (%p18) target = $region8
    $region5: #{tpu_custom_call.1} parent=1 // loop_body
      %s22 = ssub.s32 %s17, 1
      %s23 = ssub.s32 %s17, 2
      %s24 = sadd.s32 %s17, 1
      %s25 = ssub.s32 %s17, %s24
      %p26 = scmp.eq.s32.totalorder %s25, 0
      %s28 = sadd.s32 %s27, 1
      %s29 = scalar_select %p26, %s27, %s28
      %p32 = pneg %p26
      %p33 = scmp.eq.s32.totalorder %s17, 1
      %p34 = por %p32, %p33
      %p35 = scmp.ne.s32.totalorder %s27, %s30
      %p36 = scmp.eq.s32.totalorder %s17, 0
      %p37 = por %p35, %p36
      %p38 = scmp.ne.s32.totalorder %s27, %s30
      %p39 = scmp.eq.s32.totalorder %s22, 1
      %p40 = por %p38, %p39
      %p41 = scmp.ne.s32.totalorder %s30, %s31
      %p42 = scmp.eq.s32.totalorder %s22, 0
      %p43 = por %p41, %p42
      %p44 = scmp.ne.s32.totalorder %s30, %s31
      %p45 = scmp.eq.s32.totalorder %s23, 1
      %p46 = por %p44, %p45
      %p48 = scmp.ne.s32.totalorder %s31, %s47
      %p49 = scmp.eq.s32.totalorder %s23, 0
      %p50 = por %p48, %p49
      %s51 = ssub.s32 %s17, %s24
      %p52 = scmp.eq.s32.totalorder %s51, 0
      %s54 = sadd.s32 %s53, 1
      %s55 = scalar_select %p52, %s53, %s54
      %p58 = pneg %p52
      %p59 = scmp.eq.s32.totalorder %s17, 1
      %p60 = por %p58, %p59
      %p61 = scmp.ne.s32.totalorder %s53, %s56
      %p62 = scmp.eq.s32.totalorder %s17, 0
      %p63 = por %p61, %p62
      %p64 = scmp.ne.s32.totalorder %s53, %s56
      %p65 = scmp.eq.s32.totalorder %s22, 1
      %p66 = por %p64, %p65
      %p67 = scmp.ne.s32.totalorder %s56, %s57
      %p68 = scmp.eq.s32.totalorder %s22, 0
      %p69 = por %p67, %p68
      %p70 = scmp.ne.s32.totalorder %s56, %s57
      %p71 = scmp.eq.s32.totalorder %s23, 1
      %p72 = por %p70, %p71
      %p74 = scmp.ne.s32.totalorder %s57, %s73
      %p75 = scmp.eq.s32.totalorder %s23, 0
      %p76 = por %p74, %p75
      %s77 = ssub.s32 %s17, %s24
      %p78 = scmp.eq.s32.totalorder %s77, 0
      %s80 = sadd.s32 %s79, 1
      %s81 = scalar_select %p78, %s79, %s80
      %p84 = pneg %p78
      %p85 = scmp.eq.s32.totalorder %s17, 1
      %p86 = por %p84, %p85
      %p87 = scmp.ne.s32.totalorder %s79, %s82
      %p88 = scmp.eq.s32.totalorder %s17, 0
      %p89 = por %p87, %p88
      %p90 = scmp.ne.s32.totalorder %s79, %s82
      %p91 = scmp.eq.s32.totalorder %s22, 1
      %p92 = por %p90, %p91
      %p93 = scmp.ne.s32.totalorder %s82, %s83
      %p94 = scmp.eq.s32.totalorder %s22, 0
      %p95 = por %p93, %p94
      %p96 = scmp.ne.s32.totalorder %s82, %s83
      %p97 = scmp.eq.s32.totalorder %s23, 1
      %p98 = por %p96, %p97
      %p100 = scmp.ne.s32.totalorder %s83, %s99
      %p101 = scmp.eq.s32.totalorder %s23, 0
      %p102 = por %p100, %p101
      %p103 = scmp.le.s32.totalorder 1, %s17
      %p104 = scmp.lt.s32.totalorder %s17, 3
      %p105 = pnand %p103, %p104
      %p106 = pneg %p105
      // Predicated region
      $region9: #{tpu_custom_call.1} parent=5 // pred_check
        _
      $region10: #{tpu_custom_call.1} parent=5 // pred_check_branch
        %108 = sbr.rel (%p105) target = $region12
      $region11: #{tpu_custom_call.1} parent=5 // pred_region
        %s109 = ssub.s32 %s17, 1
      $region12: #{tpu_custom_call.1} parent=5 // pred_fallthru
        _
      %p110 = scmp.lt.s32.totalorder %s17, 2
      // Predicated region
      $region13: #{tpu_custom_call.1} parent=5 // pred_check
        %p111 = pneg %p110
      $region14: #{tpu_custom_call.1} parent=5 // pred_check_branch
        %113 = sbr.rel (%p111) target = $region16
      $region15: #{tpu_custom_call.1} parent=5 // pred_region
        // Predicated region
        $region17: #{tpu_custom_call.1} parent=15 // pred_check
          %p114 = pneg %p37
        $region18: #{tpu_custom_call.1} parent=15 // pred_check_branch
          %116 = sbr.rel (%p114) target = $region20
        $region19: #{tpu_custom_call.1} parent=15 // pred_region
          %s117 = sand.u32 %s27, 1
          %s118 = scalar_lea.sflag [#allocation3], %s117
          %s119 = sand.u32 %s27, 1
          %s120 = smul.addr %s119, 8
          %s121 = scalar_lea.vmem [#allocation2], %s120
          %123 = vsyncadd %s118, 0
          %s124 = smul.addr %s17, 8
          %s125 = scalar_lea.hbm %s0, %s124
          %s127 = sshll.u32 %s125, 4
          %s128 = int_to_ptr.hbm [resolvable:$true] %s127
          %s129 = sshll.u32 %s121, 4
          %s130 = int_to_ptr.vmem [resolvable:$true] %s129
          %132 = dma.hbm_to_vmem [thread:$0]  %s128, 128, %s130, %s118
        $region20: #{tpu_custom_call.1} parent=15 // pred_fallthru
          _
        // Predicated region
        $region21: #{tpu_custom_call.1} parent=15 // pred_check
          %p133 = pneg %p63
        $region22: #{tpu_custom_call.1} parent=15 // pred_check_branch
          %135 = sbr.rel (%p133) target = $region24
        $region23: #{tpu_custom_call.1} parent=15 // pred_region
          %s136 = sand.u32 %s53, 1
          %s137 = scalar_lea.sflag [#allocation6], %s136
          %s138 = sand.u32 %s53, 1
          %s139 = smul.addr %s138, 8
          %s140 = scalar_lea.vmem [#allocation5], %s139
          %142 = vsyncadd %s137, 0
          %s143 = smul.addr %s17, 8
          %s144 = scalar_lea.hbm %s1, %s143
          %s146 = sshll.u32 %s144, 4
          %s147 = int_to_ptr.hbm [resolvable:$true] %s146
          %s148 = sshll.u32 %s140, 4
          %s149 = int_to_ptr.vmem [resolvable:$true] %s148
          %151 = dma.hbm_to_vmem [thread:$0]  %s147, 128, %s149, %s137
        $region24: #{tpu_custom_call.1} parent=15 // pred_fallthru
          _
      $region16: #{tpu_custom_call.1} parent=5 // pred_fallthru
        _
      %p152 = scmp.le.s32.totalorder 1, %s17
      %p153 = scmp.lt.s32.totalorder %s17, 3
      %p154 = pnand %p152, %p153
      %p155 = pneg %p154
      // Predicated region
      $region25: #{tpu_custom_call.1} parent=5 // pred_check
        _
      $region26: #{tpu_custom_call.1} parent=5 // pred_check_branch
        %157 = sbr.rel (%p154) target = $region28
      $region27: #{tpu_custom_call.1} parent=5 // pred_region
        %s158 = ssub.s32 %s17, 1
        %s159 = sand.u32 %s30, 1
        %s160 = scalar_lea.sflag [#allocation3], %s159
        %s161 = sand.u32 %s30, 1
        %s162 = smul.addr %s161, 8
        %s163 = scalar_lea.vmem [#allocation2], %s162
        // Predicated region
        $region29: #{tpu_custom_call.1} parent=27 // pred_check
          %p164 = pneg %p43
        $region30: #{tpu_custom_call.1} parent=27 // pred_check_branch
          %166 = sbr.rel (%p164) target = $region32
        $region31: #{tpu_custom_call.1} parent=27 // pred_region
          %168 = dma.done %s160, 128
        $region32: #{tpu_custom_call.1} parent=27 // pred_fallthru
          _
        %s169 = sand.u32 %s56, 1
        %s170 = scalar_lea.sflag [#allocation6], %s169
        %s171 = sand.u32 %s56, 1
        %s172 = smul.addr %s171, 8
        %s173 = scalar_lea.vmem [#allocation5], %s172
        // Predicated region
        $region33: #{tpu_custom_call.1} parent=27 // pred_check
          %p174 = pneg %p69
        $region34: #{tpu_custom_call.1} parent=27 // pred_check_branch
          %176 = sbr.rel (%p174) target = $region36
        $region35: #{tpu_custom_call.1} parent=27 // pred_region
          %178 = dma.done %s170, 128
        $region36: #{tpu_custom_call.1} parent=27 // pred_fallthru
          _
        %s179 = sand.u32 %s30, 1
        %s180 = scalar_lea.sflag [#allocation3], %s179
        %s181 = sand.u32 %s30, 1
        %s182 = smul.addr %s181, 8
        %s183 = scalar_lea.vmem [#allocation2], %s182
        %p184 = pneg %p43
        %p185 = pneg %p40
        %s186 = sand.u32 %s56, 1
        %s187 = scalar_lea.sflag [#allocation6], %s186
        %s188 = sand.u32 %s56, 1
        %s189 = smul.addr %s188, 8
        %s190 = scalar_lea.vmem [#allocation5], %s189
        %p191 = pneg %p69
        %p192 = pneg %p66
        %p193 = pneg %p95
        %p194 = pneg %p92
        %s195 = sand.u32 %s82, 1
        %s196 = scalar_lea.sflag [#allocation4], %s195
        %s197 = sand.u32 %s82, 1
        %s198 = smul.addr %s197, 8
        %s199 = scalar_lea.vmem [#allocation7], %s198
        %v200 = vld [vmem:[%s163] sm:$0xff]
        %v201 = vld [vmem:[%s173] sm:$0xff]
        %v202 = vand.u32 2147483647, %v200
        %v203 = vsub.f32 0.0, %v202
        %v204 = vmul.f32 %v203, 1.442695
        %v205 = vpow.pop %v204
        %v206 = vmax.f32 %v200, 0.0
        %v207 = vmul.f32 %v200, %v201
        %v208 = vsub.f32 %v206, %v207
        %v209 = vadd.f32 %v205, 1.0
        %v210 = vlog2.pop %v209
        %v211 = vmul.f32 %v210, 0.6931472
        %v212 = vmul.f32 -0.5, %v205
        %v213 = vadd.f32 %v212, 1.0
        %v214 = vmul.f32 %v213, %v205
        %v215 = vand.u32 2147483647, %v205
        %vm216 = vcmp.lt.f32.partialorder %v215, 0.0004427343
        %v217 = vsel %vm216, %v214, %v211
        %v218 = vadd.f32 %v208, %v217
        %v219 = vadd.f32 %v205, 1.0
        %v220 = vrcp.pop %v219
        %v221 = vmul.f32 %v219, %v220
        %v222 = vsub.f32 1.0, %v221
        %v223 = vmul.f32 %v220, %v222
        %v224 = vadd.f32 %v220, %v223
        %vm225 = vweird.f32 %v219
        %vm226 = vweird.f32 %v220
        %vm227 = vmor %vm225, %vm226
        %v228 = vsel %vm227, %v220, %v224
        %v229 = vand.u32 2147483647, %v219
        %vm230 = vcmp.eq.f32.partialorder %v229, 8.507059e+37
        %v231 = vand.u32 %v219, 2147483648
        %v232 = vor.u32 1.1754944e-38, %v231
        %v233 = vsel %vm230, %v232, %v228
        %vm234 = vcmp.ge.f32.partialorder %v200, 0.0
        %v235 = vmul.f32 %v205, %v233
        %v236 = vsel %vm234, %v233, %v235
        %v237 = vmul.f32 %v201, %v236
        %v238 = vsub.f32 1.0, %v201
        %v239 = vsub.f32 1.0, %v236
        %v240 = vmul.f32 %v238, %v239
        %v241 = vadd.f32 %v237, %v240
        %v242 = vmul.f32 %v201, 0.25
        %v243 = vmul.f32 %v238, 0.75
        %v244 = vadd.f32 %v242, %v243
        %v245 = vsub.f32 1.0, %v241
        %v246 = vmax.f32 %v245, 0.0
        %v247 = vrsqrt.pop %v246
        %v248 = vmul.f32 %v247, %v246
        %v249 = vmul.f32 %v248, %v247
        %v250 = vmul.f32 0.5, %v249
        %v251 = vsub.f32 1.5, %v250
        %v252 = vmul.f32 %v247, %v251
        %v253 = vmul.f32 %v246, %v252
        %vm254 = vcmp.eq.f32.partialorder %v246, inf
        %v255 = vsel %vm254, %v246, %v253
        %vm256 = vcmp.eq.f32.partialorder %v246, 0.0
        %v257 = vand.u32 %v246, 2147483648
        %v258 = vsel %vm256, %v257, %v255
        %v259 = vmul.f32 %v246, %v258
        %v260 = vmul.f32 %v218, %v244
        %v261 = vmul.f32 %v260, %v259
        %v262 = vadd.f32 %v261, 0.0
        %263 = vst [vmem:[%s199] sm:$0xff] %v262
        %s264 = sand.u32 %s82, 1
        %s265 = scalar_lea.sflag [#allocation4], %s264
        %s266 = sand.u32 %s82, 1
        %s267 = smul.addr %s266, 8
        %s268 = scalar_lea.vmem [#allocation7], %s267
        // Predicated region
        $region37: #{tpu_custom_call.1} parent=27 // pred_check
          %p269 = pneg %p92
        $region38: #{tpu_custom_call.1} parent=27 // pred_check_branch
          %271 = sbr.rel (%p269) target = $region40
        $region39: #{tpu_custom_call.1} parent=27 // pred_region
          %273 = vsyncadd %s265, 0
          %s274 = smul.addr %s22, 8
          %s275 = scalar_lea.hbm %s2, %s274
          %s277 = sshll.u32 %s268, 4
          %s278 = int_to_ptr.vmem [resolvable:$true] %s277
          %s279 = sshll.u32 %s275, 4
          %s280 = int_to_ptr.hbm [resolvable:$true] %s279
          %282 = dma.vmem_to_hbm [thread:$0]  %s278, 128, %s280, %s265
        $region40: #{tpu_custom_call.1} parent=27 // pred_fallthru
          _
      $region28: #{tpu_custom_call.1} parent=5 // pred_fallthru
        _
      %p283 = scmp.le.s32.totalorder 2, %s17
      // Predicated region
      $region41: #{tpu_custom_call.1} parent=5 // pred_check
        %p284 = pneg %p283
      $region42: #{tpu_custom_call.1} parent=5 // pred_check_branch
        %286 = sbr.rel (%p284) target = $region44
      $region43: #{tpu_custom_call.1} parent=5 // pred_region
        %s287 = ssub.s32 %s17, 2
        // Predicated region
        $region45: #{tpu_custom_call.1} parent=43 // pred_check
          %p288 = pneg %p98
        $region46: #{tpu_custom_call.1} parent=43 // pred_check_branch
          %290 = sbr.rel (%p288) target = $region48
        $region47: #{tpu_custom_call.1} parent=43 // pred_region
          %s291 = sand.u32 %s83, 1
          %s292 = scalar_lea.sflag [#allocation4], %s291
          %s293 = sand.u32 %s83, 1
          %s294 = smul.addr %s293, 8
          %s295 = scalar_lea.vmem [#allocation7], %s294
          %297 = dma.done %s292, 128
        $region48: #{tpu_custom_call.1} parent=43 // pred_fallthru
          _
      $region44: #{tpu_custom_call.1} parent=5 // pred_fallthru
        _
    $region6: #{tpu_custom_call.1} parent=1 // loop_footer
      %s21 = sadd.s32 1, %s17
    $region7: #{tpu_custom_call.1} parent=1 // loop_footer_branch
      %16 = sbr.rel target = $region3
    $region8: #{tpu_custom_call.1} parent=1 // loop_exit
      _
    %298 = vsyncpa [#allocation3], 1
    %s299 = scalar_lea.sflag [#allocation3], 1
    %300 = vsyncpa %s299, 1
    %301 = vsyncpa [#allocation6], 1
    %s302 = scalar_lea.sflag [#allocation6], 1
    %303 = vsyncpa %s302, 1
    %304 = vsyncpa [#allocation4], 1
    %s305 = scalar_lea.sflag [#allocation4], 1
    %306 = vsyncpa %s305, 1

</llo_original>
